<compile_context>
chip_gen: v7x
topology: tpu7x:2x2x1
jax: 0.10.0
libtpu: 0.0.40
codegen_flags: <defaults>
</compile_context>

<pallas_src>
import functools

import jax
import jax.numpy as jnp
from jax import lax
from jax.experimental import pallas as pl
from jax.experimental.pallas import tpu as pltpu


def _skip_se_kernel(x_ref, gamma_ref, beta_ref, w_ref, b_ref, o_ref,
                    sum_ref, sq_ref, a_ref, d_ref, *, eps, hw):
    """x_ref/o_ref: (B, C, TILE_HW); gamma/beta/b: (1, C); w: (Cin, Cout).

    Grid = (phase, tile).  phase 0: accumulate per-(B,C) sum / sumsq.
    phase 1, tile 0: fold BN + sigmoid gate into per-(B,C) A/D.
    phase 1, all tiles: o = x * A + D.
    """
    phase = pl.program_id(0)
    t = pl.program_id(1)
    B, C, _ = x_ref.shape
    n = float(B * hw)  # elements per channel for the batch statistics

    # ---- init persistent accumulators (scratch persists across grid steps) ----
    @pl.when((phase == 0) & (t == 0))
    def _init():
        sum_ref[...] = jnp.zeros_like(sum_ref)
        sq_ref[...] = jnp.zeros_like(sq_ref)

    # ---- phase 0: per-(B,C) spatial sums, f32 accumulation, tile-sized upcast only ----
    @pl.when(phase == 0)
    def _accumulate():
        xf = x_ref[...].astype(jnp.float32)              # (B, C, T)
        sum_ref[...] += jnp.sum(xf, axis=2)              # lane reduce -> (B, C)
        sq_ref[...] += jnp.sum(xf * xf, axis=2)

    # ---- phase 1 boundary: BN stats, analytic pooling, excite, fold into A/D ----
    @pl.when((phase == 1) & (t == 0))
    def _excite():
        s_bc = sum_ref[...]                              # (B, C)
        q_bc = sq_ref[...]                               # (B, C)
        sum_c = jnp.sum(s_bc, axis=0, keepdims=True)     # (1, C)
        sq_c = jnp.sum(q_bc, axis=0, keepdims=True)      # (1, C)
        mean_c = sum_c * (1.0 / n)
        var_c = jnp.maximum(sq_c * (1.0 / n) - mean_c * mean_c, 0.0)  # biased variance
        inv_std = lax.rsqrt(var_c + eps)
        scale_c = inv_std * gamma_ref[...]               # (1, C)
        shift_c = beta_ref[...] - mean_c * scale_c       # (1, C)

        # pooled_{b,c} = mean_hw(bn) = (sum_bc / HW) * scale_c + shift_c
        pooled = s_bc * (1.0 / hw) * scale_c + shift_c   # (B, C)

        w = w_ref[...]                                   # (Cin, Cout)
        if C <= 128:
            # Tiny channel count: VPU broadcast-mul + sublane reduce (skip the MXU).
            y = jnp.sum(pooled[:, :, None] * w[None, :, :], axis=1) + b_ref[...]
        else:
            y = jnp.dot(pooled, w, preferred_element_type=jnp.float32) + b_ref[...]
        gate = jax.nn.sigmoid(y)                         # (B, C)

        a_ref[...] = scale_c * gate                      # per-(B,C) scale
        d_ref[...] = shift_c * gate                      # per-(B,C) offset

    # ---- phase 1: single fused mul+add per element, one store per element ----
    @pl.when(phase == 1)
    def _scale():
        xf = x_ref[...].astype(jnp.float32)
        a = a_ref[...][:, :, None]
        d = d_ref[...][:, :, None]
        o_ref[...] = (xf * a + d).astype(o_ref.dtype)


def _pick_tile_hw(hw, bytes_per_col, target_block_bytes=2 << 20):
    """Largest multiple of 128 that divides hw and keeps a block near the byte target."""
    if hw % 128 != 0:
        return hw  # fall back to a full-extent block (block == array dim is allowed)
    max_cols = max(128, (target_block_bytes // max(bytes_per_col, 1)) // 128 * 128)
    t = min(hw, max_cols)
    while hw % t != 0:
        t -= 128
    return t


@functools.partial(jax.jit, static_argnames=("eps", "tile_hw"))
def skip_squeeze_excitation(x, gamma, beta, conv_w, conv_b, *, eps=1e-5, tile_hw=None):
    """Forward of Skip_Sqeeze_Exication.

    x: (B, C, H, W); gamma/beta: (C,) BatchNorm affine params;
    conv_w: (Cout, Cin) 1x1-conv weight; conv_b: (Cout,) conv bias.
    """
    B, C, H, W = x.shape
    Cout, Cin = conv_w.shape
    assert Cin == C and Cout == C, "skip-SE broadcast multiply needs out_channels == in_channels"
    HW = H * W

    if tile_hw is None:
        tile_hw = _pick_tile_hw(HW, B * C * x.dtype.itemsize)
    assert tile_hw == HW or (HW % tile_hw == 0 and tile_hw % 128 == 0), (
        "tile_hw must divide H*W and be a multiple of 128 (or equal H*W)")
    num_tiles = HW // tile_hw

    x3 = x.reshape(B, C, HW)                             # H*W on the lane axis (lane-dense)
    gamma2 = gamma.reshape(1, C).astype(jnp.float32)
    beta2 = beta.reshape(1, C).astype(jnp.float32)
    w_t = conv_w.T.astype(jnp.float32)                   # (Cin, Cout): kernel does pooled @ w_t
    b2 = conv_b.reshape(1, Cout).astype(jnp.float32)

    # Explicit VMEM budget: double-buffered input + output tile + headroom for
    # params/scratch; capped to stay under v7x's 64 MiB per-core VMEM.
    block_bytes = B * C * tile_hw * x.dtype.itemsize
    vmem_limit = int(min(64 << 20, max(8 << 20, 4 * block_bytes + (4 << 20))))

    out3 = pl.pallas_call(
        functools.partial(_skip_se_kernel, eps=float(eps), hw=HW),
        out_shape=jax.ShapeDtypeStruct((B, C, HW), x.dtype),
        grid=(2, num_tiles),                             # (phase, spatial tile)
        in_specs=[
            pl.BlockSpec((B, C, tile_hw), lambda p, t: (0, 0, t)),   # streamed x tile
            pl.BlockSpec((1, C), lambda p, t: (0, 0)),               # BN gamma
            pl.BlockSpec((1, C), lambda p, t: (0, 0)),               # BN beta
            pl.BlockSpec((Cin, Cout), lambda p, t: (0, 0)),          # 1x1 conv weight (transposed)
            pl.BlockSpec((1, Cout), lambda p, t: (0, 0)),            # conv bias
        ],
        # During phase 0 the output block index is pinned to 0 (no writes happen),
        # so no garbage writebacks occur; phase 1 visits and writes every tile.
        out_specs=pl.BlockSpec((B, C, tile_hw), lambda p, t: (0, 0, t * p)),
        scratch_shapes=[
            pltpu.VMEM((B, C), jnp.float32),   # per-(B,C) sum
            pltpu.VMEM((B, C), jnp.float32),   # per-(B,C) sum of squares
            pltpu.VMEM((B, C), jnp.float32),   # folded scale A
            pltpu.VMEM((B, C), jnp.float32),   # folded offset D
        ],
        compiler_params=pltpu.CompilerParams(
            dimension_semantics=("arbitrary", "arbitrary"),  # both axes carry state
            vmem_limit_bytes=vmem_limit,
        ),
    )(x3, gamma2, beta2, w_t, b2)

    return out3.reshape(B, C, H, W)


def _reference(x, gamma, beta, conv_w, conv_b, eps=1e-5):
    """Pure-JAX reference matching the PyTorch forward of the fresh module."""
    mean = jnp.mean(x, axis=(0, 2, 3), keepdims=True)
    var = jnp.mean((x - mean) ** 2, axis=(0, 2, 3), keepdims=True)   # biased variance
    bn = (x - mean) / jnp.sqrt(var + eps) * gamma.reshape(1, -1, 1, 1) + beta.reshape(1, -1, 1, 1)
    pooled = jnp.mean(bn, axis=(2, 3), keepdims=True)                # (B, C, 1, 1)
    y = jnp.einsum("oc,bcij->boij", conv_w, pooled) + conv_b.reshape(1, -1, 1, 1)
    return bn * jax.nn.sigmoid(y)


if __name__ == "__main__":
    # Small shapes consistent with the module: batch=2, channels=8, spatial=16x16.
    B, C, H, W = 2, 8, 16, 16

    key = jax.random.PRNGKey(0)
    kx, kw, kb = jax.random.split(key, 3)

    x = jax.random.normal(kx, (B, C, H, W), jnp.float32)
    gamma = jnp.ones((C,), jnp.float32)    # BatchNorm2d weight -> 1 (per _init_weight)
    beta = jnp.zeros((C,), jnp.float32)    # BatchNorm2d bias   -> 0 (per _init_weight)
    # Conv2d 1x1 weight: kaiming_normal_(nonlinearity='relu') -> std = sqrt(2 / fan_in)
    conv_w = jax.random.normal(kw, (C, C), jnp.float32) * (2.0 / C) ** 0.5
    lim = 1.0 / (C ** 0.5)                 # default PyTorch conv bias init range
    conv_b = jax.random.uniform(kb, (C,), jnp.float32, -lim, lim)

    ref = _reference(x, gamma, beta, conv_w, conv_b)

    # Multi-tile path (exercises the phase-0 accumulation across spatial tiles).
    out = skip_squeeze_excitation(x, gamma, beta, conv_w, conv_b, tile_hw=128)
    jax.block_until_ready(out)
    assert out.shape == (B, C, H, W)
    assert jnp.allclose(out, ref, atol=1e-4, rtol=1e-4), float(jnp.max(jnp.abs(out - ref)))

    # Auto-tiled path (single tile for this small map).
    out2 = skip_squeeze_excitation(x, gamma, beta, conv_w, conv_b)
    jax.block_until_ready(out2)
    assert jnp.allclose(out2, ref, atol=1e-4, rtol=1e-4), float(jnp.max(jnp.abs(out2 - ref)))

    print("KERNEL_OK")
</pallas_src>

<mosaic_0001>
module attributes {stable_mosaic.version = 11 : i64} {
  func.func @_skip_se_kernel(%arg0: i32, %arg1: i32, %arg2: memref<2x8x128xf32, #tpu.memory_space<vmem>>, %arg3: memref<1x8xf32, #tpu.memory_space<vmem>>, %arg4: memref<1x8xf32, #tpu.memory_space<vmem>>, %arg5: memref<8x8xf32, #tpu.memory_space<vmem>>, %arg6: memref<1x8xf32, #tpu.memory_space<vmem>>, %arg7: memref<2x8x128xf32, #tpu.memory_space<vmem>>, %arg8: memref<2x8xf32, #tpu.memory_space<vmem>>, %arg9: memref<2x8xf32, #tpu.memory_space<vmem>>, %arg10: memref<2x8xf32, #tpu.memory_space<vmem>>, %arg11: memref<2x8xf32, #tpu.memory_space<vmem>>) attributes {dimension_semantics = [#tpu.dimension_semantics<arbitrary>, #tpu.dimension_semantics<arbitrary>], iteration_bounds = array<i64: 2, 2>, scalar_prefetch = 0 : i64, scratch_operands = 4 : i64, tpu.core_type = #tpu.core_type<tc>, window_params = [{transform_indices = @transform_0, window_bounds = array<i64: 2, 8, 128>}, {pipeline_mode = #tpu.pipeline_mode<synchronous>, transform_indices = @transform_1, window_bounds = array<i64: 1, 8>}, {pipeline_mode = #tpu.pipeline_mode<synchronous>, transform_indices = @transform_2, window_bounds = array<i64: 1, 8>}, {pipeline_mode = #tpu.pipeline_mode<synchronous>, transform_indices = @transform_3, window_bounds = array<i64: 8, 8>}, {pipeline_mode = #tpu.pipeline_mode<synchronous>, transform_indices = @transform_4, window_bounds = array<i64: 1, 8>}, {transform_indices = @transform_5, window_bounds = array<i64: 2, 8, 128>}]} {
    %c0_i32 = arith.constant 0 : i32
    %0 = arith.cmpi eq, %arg0, %c0_i32 : i32
    %c0_i32_0 = arith.constant 0 : i32
    %1 = arith.cmpi eq, %arg1, %c0_i32_0 : i32
    %2 = arith.andi %0, %1 : i1
    %3 = arith.extui %2 : i1 to i32
    %c0_i32_1 = arith.constant 0 : i32
    %4 = arith.cmpi ne, %3, %c0_i32_1 : i32
    scf.if %4 {
      %cst = arith.constant 0.000000e+00 : f32
      %16 = vector.broadcast %cst : f32 to vector<2x8xf32>
      %c0 = arith.constant 0 : index
      %c0_8 = arith.constant 0 : index
      %17 = vector.load %arg8[%c0, %c0_8] : memref<2x8xf32, #tpu.memory_space<vmem>>, vector<2x8xf32>
      tpu.vector_store %arg8[%c0, %c0_8], %16 {strides = array<i32>} : memref<2x8xf32, #tpu.memory_space<vmem>>, vector<2x8xf32>,
      %cst_9 = arith.constant 0.000000e+00 : f32
      %18 = vector.broadcast %cst_9 : f32 to vector<2x8xf32>
      %c0_10 = arith.constant 0 : index
      %c0_11 = arith.constant 0 : index
      %19 = vector.load %arg9[%c0_10, %c0_11] : memref<2x8xf32, #tpu.memory_space<vmem>>, vector<2x8xf32>
      tpu.vector_store %arg9[%c0_10, %c0_11], %18 {strides = array<i32>} : memref<2x8xf32, #tpu.memory_space<vmem>>, vector<2x8xf32>,
    } else {
    }
    %c0_i32_2 = arith.constant 0 : i32
    %5 = arith.cmpi eq, %arg0, %c0_i32_2 : i32
    %6 = arith.extui %5 : i1 to i32
    %c0_i32_3 = arith.constant 0 : i32
    %7 = arith.cmpi ne, %6, %c0_i32_3 : i32
    scf.if %7 {
      %c0 = arith.constant 0 : index
      %c0_8 = arith.constant 0 : index
      %c0_9 = arith.constant 0 : index
      %16 = vector.load %arg2[%c0, %c0_8, %c0_9] : memref<2x8x128xf32, #tpu.memory_space<vmem>>, vector<2x8x128xf32>
      %c0_10 = arith.constant 0 : index
      %c0_11 = arith.constant 0 : index
      %17 = vector.load %arg8[%c0_10, %c0_11] : memref<2x8xf32, #tpu.memory_space<vmem>>, vector<2x8xf32>
      %cst = arith.constant dense<0.000000e+00> : vector<2x8xf32>
      %18 = vector.multi_reduction <add>, %16, %cst [2] : vector<2x8x128xf32> to vector<2x8xf32>
      %19 = arith.addf %17, %18 : vector<2x8xf32>
      %c0_12 = arith.constant 0 : index
      %c0_13 = arith.constant 0 : index
      %20 = vector.load %arg8[%c0_12, %c0_13] : memref<2x8xf32, #tpu.memory_space<vmem>>, vector<2x8xf32>
      tpu.vector_store %arg8[%c0_12, %c0_13], %19 {strides = array<i32>} : memref<2x8xf32, #tpu.memory_space<vmem>>, vector<2x8xf32>,
      %c0_14 = arith.constant 0 : index
      %c0_15 = arith.constant 0 : index
      %21 = vector.load %arg9[%c0_14, %c0_15] : memref<2x8xf32, #tpu.memory_space<vmem>>, vector<2x8xf32>
      %22 = arith.mulf %16, %16 : vector<2x8x128xf32>
      %cst_16 = arith.constant dense<0.000000e+00> : vector<2x8xf32>
      %23 = vector.multi_reduction <add>, %22, %cst_16 [2] : vector<2x8x128xf32> to vector<2x8xf32>
      %24 = arith.addf %21, %23 : vector<2x8xf32>
      %c0_17 = arith.constant 0 : index
      %c0_18 = arith.constant 0 : index
      %25 = vector.load %arg9[%c0_17, %c0_18] : memref<2x8xf32, #tpu.memory_space<vmem>>, vector<2x8xf32>
      tpu.vector_store %arg9[%c0_17, %c0_18], %24 {strides = array<i32>} : memref<2x8xf32, #tpu.memory_space<vmem>>, vector<2x8xf32>,
    } else {
    }
    %c1_i32 = arith.constant 1 : i32
    %8 = arith.cmpi eq, %arg0, %c1_i32 : i32
    %c0_i32_4 = arith.constant 0 : i32
    %9 = arith.cmpi eq, %arg1, %c0_i32_4 : i32
    %10 = arith.andi %8, %9 : i1
    %11 = arith.extui %10 : i1 to i32
    %c0_i32_5 = arith.constant 0 : i32
    %12 = arith.cmpi ne, %11, %c0_i32_5 : i32
    scf.if %12 {
      %c0 = arith.constant 0 : index
      %c0_8 = arith.constant 0 : index
      %16 = vector.load %arg8[%c0, %c0_8] : memref<2x8xf32, #tpu.memory_space<vmem>>, vector<2x8xf32>
      %c0_9 = arith.constant 0 : index
      %c0_10 = arith.constant 0 : index
      %17 = vector.load %arg9[%c0_9, %c0_10] : memref<2x8xf32, #tpu.memory_space<vmem>>, vector<2x8xf32>
      %cst = arith.constant dense<0.000000e+00> : vector<8xf32>
      %18 = vector.multi_reduction <add>, %16, %cst [0] : vector<2x8xf32> to vector<8xf32>
      %19 = vector.shape_cast %18 : vector<8xf32> to vector<1x8xf32>
      %cst_11 = arith.constant dense<0.000000e+00> : vector<8xf32>
      %20 = vector.multi_reduction <add>, %17, %cst_11 [0] : vector<2x8xf32> to vector<8xf32>
      %21 = vector.shape_cast %20 : vector<8xf32> to vector<1x8xf32>
      %cst_12 = arith.constant 0.001953125 : f32
      %22 = vector.broadcast %cst_12 : f32 to vector<1x8xf32>
      %23 = arith.mulf %19, %22 : vector<1x8xf32>
      %cst_13 = arith.constant 0.001953125 : f32
      %24 = vector.broadcast %cst_13 : f32 to vector<1x8xf32>
      %25 = arith.mulf %21, %24 : vector<1x8xf32>
      %26 = arith.mulf %23, %23 : vector<1x8xf32>
      %27 = arith.subf %25, %26 : vector<1x8xf32>
      %cst_14 = arith.constant 0.000000e+00 : f32
      %28 = vector.broadcast %cst_14 : f32 to vector<1x8xf32>
      %29 = arith.maximumf %27, %28 : vector<1x8xf32>
      %cst_15 = arith.constant 9.99999974E-6 : f32
      %30 = vector.broadcast %cst_15 : f32 to vector<1x8xf32>
      %31 = arith.addf %29, %30 : vector<1x8xf32>
      %32 = math.rsqrt %31 : vector<1x8xf32>
      %c0_16 = arith.constant 0 : index
      %c0_17 = arith.constant 0 : index
      %33 = vector.load %arg3[%c0_16, %c0_17] : memref<1x8xf32, #tpu.memory_space<vmem>>, vector<1x8xf32>
      %34 = arith.mulf %32, %33 : vector<1x8xf32>
      %c0_18 = arith.constant 0 : index
      %c0_19 = arith.constant 0 : index
      %35 = vector.load %arg4[%c0_18, %c0_19] : memref<1x8xf32, #tpu.memory_space<vmem>>, vector<1x8xf32>
      %36 = arith.mulf %23, %34 : vector<1x8xf32>
      %37 = arith.subf %35, %36 : vector<1x8xf32>
      %cst_20 = arith.constant 3.906250e-03 : f32
      %38 = vector.broadcast %cst_20 : f32 to vector<2x8xf32>
      %39 = arith.mulf %16, %38 : vector<2x8xf32>
      %40 = vector.broadcast %34 : vector<1x8xf32> to vector<2x8xf32>
      %41 = arith.mulf %39, %40 : vector<2x8xf32>
      %42 = vector.broadcast %37 : vector<1x8xf32> to vector<2x8xf32>
      %43 = arith.addf %41, %42 : vector<2x8xf32>
      %c0_21 = arith.constant 0 : index
      %c0_22 = arith.constant 0 : index
      %44 = vector.load %arg5[%c0_21, %c0_22] : memref<8x8xf32, #tpu.memory_space<vmem>>, vector<8x8xf32>
      %45 = vector.shape_cast %43 : vector<2x8xf32> to vector<2x8x1xf32>
      %46 = vector.shape_cast %44 : vector<8x8xf32> to vector<1x8x8xf32>
      %47 = vector.broadcast %45 : vector<2x8x1xf32> to vector<2x8x8xf32>
      %48 = vector.broadcast %46 : vector<1x8x8xf32> to vector<2x8x8xf32>
      %49 = arith.mulf %47, %48 : vector<2x8x8xf32>
      %cst_23 = arith.constant dense<0.000000e+00> : vector<2x8xf32>
      %50 = vector.multi_reduction <add>, %49, %cst_23 [1] : vector<2x8x8xf32> to vector<2x8xf32>
      %c0_24 = arith.constant 0 : index
      %c0_25 = arith.constant 0 : index
      %51 = vector.load %arg6[%c0_24, %c0_25] : memref<1x8xf32, #tpu.memory_space<vmem>>, vector<1x8xf32>
      %52 = vector.broadcast %51 : vector<1x8xf32> to vector<2x8xf32>
      %53 = arith.addf %50, %52 : vector<2x8xf32>
      %54 = arith.negf %53 : vector<2x8xf32>
      %55 = math.exp %54 : vector<2x8xf32>
      %cst_26 = arith.constant 1.000000e+00 : f32
      %56 = vector.broadcast %cst_26 : f32 to vector<2x8xf32>
      %57 = arith.addf %56, %55 : vector<2x8xf32>
      %58 = arith.divf %56, %57 : vector<2x8xf32>
      %59 = vector.broadcast %34 : vector<1x8xf32> to vector<2x8xf32>
      %60 = arith.mulf %59, %58 : vector<2x8xf32>
      %c0_27 = arith.constant 0 : index
      %c0_28 = arith.constant 0 : index
      %61 = vector.load %arg10[%c0_27, %c0_28] : memref<2x8xf32, #tpu.memory_space<vmem>>, vector<2x8xf32>
      tpu.vector_store %arg10[%c0_27, %c0_28], %60 {strides = array<i32>} : memref<2x8xf32, #tpu.memory_space<vmem>>, vector<2x8xf32>,
      %62 = vector.broadcast %37 : vector<1x8xf32> to vector<2x8xf32>
      %63 = arith.mulf %62, %58 : vector<2x8xf32>
      %c0_29 = arith.constant 0 : index
      %c0_30 = arith.constant 0 : index
      %64 = vector.load %arg11[%c0_29, %c0_30] : memref<2x8xf32, #tpu.memory_space<vmem>>, vector<2x8xf32>
      tpu.vector_store %arg11[%c0_29, %c0_30], %63 {strides = array<i32>} : memref<2x8xf32, #tpu.memory_space<vmem>>, vector<2x8xf32>,
    } else {
    }
    %c1_i32_6 = arith.constant 1 : i32
    %13 = arith.cmpi eq, %arg0, %c1_i32_6 : i32
    %14 = arith.extui %13 : i1 to i32
    %c0_i32_7 = arith.constant 0 : i32
    %15 = arith.cmpi ne, %14, %c0_i32_7 : i32
    scf.if %15 {
      %c0 = arith.constant 0 : index
      %c0_8 = arith.constant 0 : index
      %c0_9 = arith.constant 0 : index
      %16 = vector.load %arg2[%c0, %c0_8, %c0_9] : memref<2x8x128xf32, #tpu.memory_space<vmem>>, vector<2x8x128xf32>
      %c0_10 = arith.constant 0 : index
      %c0_11 = arith.constant 0 : index
      %17 = vector.load %arg10[%c0_10, %c0_11] : memref<2x8xf32, #tpu.memory_space<vmem>>, vector<2x8xf32>
      %18 = vector.shape_cast %17 : vector<2x8xf32> to vector<2x8x1xf32>
      %c0_12 = arith.constant 0 : index
      %c0_13 = arith.constant 0 : index
      %19 = vector.load %arg11[%c0_12, %c0_13] : memref<2x8xf32, #tpu.memory_space<vmem>>, vector<2x8xf32>
      %20 = vector.shape_cast %19 : vector<2x8xf32> to vector<2x8x1xf32>
      %21 = vector.broadcast %18 : vector<2x8x1xf32> to vector<2x8x128xf32>
      %22 = arith.mulf %16, %21 : vector<2x8x128xf32>
      %23 = vector.broadcast %20 : vector<2x8x1xf32> to vector<2x8x128xf32>
      %24 = arith.addf %22, %23 : vector<2x8x128xf32>
      %c0_14 = arith.constant 0 : index
      %c0_15 = arith.constant 0 : index
      %c0_16 = arith.constant 0 : index
      %25 = vector.load %arg7[%c0_14, %c0_15, %c0_16] : memref<2x8x128xf32, #tpu.memory_space<vmem>>, vector<2x8x128xf32>
      tpu.vector_store %arg7[%c0_14, %c0_15, %c0_16], %24 {strides = array<i32>} : memref<2x8x128xf32, #tpu.memory_space<vmem>>, vector<2x8x128xf32>,
    } else {
    }
    return
  }
  func.func @transform_0(%arg0: i32, %arg1: i32) -> (i32, i32, i32) {
    %c0_i32 = arith.constant 0 : i32
    %c0_i32_0 = arith.constant 0 : i32
    %c0_i32_1 = arith.constant 0 : i32
    return %c0_i32, %c0_i32_0, %arg1 : i32, i32, i32
  }
  func.func @transform_1(%arg0: i32, %arg1: i32) -> (i32, i32) {
    %c0_i32 = arith.constant 0 : i32
    %c0_i32_0 = arith.constant 0 : i32
    %c0_i32_1 = arith.constant 0 : i32
    return %c0_i32, %c0_i32_0 : i32, i32
  }
  func.func @transform_2(%arg0: i32, %arg1: i32) -> (i32, i32) {
    %c0_i32 = arith.constant 0 : i32
    %c0_i32_0 = arith.constant 0 : i32
    %c0_i32_1 = arith.constant 0 : i32
    return %c0_i32, %c0_i32_0 : i32, i32
  }
  func.func @transform_3(%arg0: i32, %arg1: i32) -> (i32, i32) {
    %c0_i32 = arith.constant 0 : i32
    %c0_i32_0 = arith.constant 0 : i32
    %c0_i32_1 = arith.constant 0 : i32
    return %c0_i32, %c0_i32_0 : i32, i32
  }
  func.func @transform_4(%arg0: i32, %arg1: i32) -> (i32, i32) {
    %c0_i32 = arith.constant 0 : i32
    %c0_i32_0 = arith.constant 0 : i32
    %c0_i32_1 = arith.constant 0 : i32
    return %c0_i32, %c0_i32_0 : i32, i32
  }
  func.func @transform_5(%arg0: i32, %arg1: i32) -> (i32, i32, i32) {
    %0 = arith.muli %arg1, %arg0 : i32
    %c0_i32 = arith.constant 0 : i32
    %c0_i32_0 = arith.constant 0 : i32
    %c0_i32_1 = arith.constant 0 : i32
    return %c0_i32, %c0_i32_0, %0 : i32, i32, i32
  }
}

</mosaic_0001>

<llo_original>
// kernel: skip_squeeze_excitation.1
$region0: #{skip_squeeze_excitation.1}
  #allocation0 [shape = 'u32[]', space=smem, size = 0x4, offset = 0x4, fixed_abs, tag = 'smem constant byte address 0x4 - core index']
  #allocation1 [shape = 'u32[144,128]{1,0:T(1,128)}', space=vmem, size = 0x12000, scoped, tag = 'internal scratch']
  #allocation2 [shape = 'f32[2,8]{1,0:T(2,128)}', space=vmem, size = 0x400, scoped, tag = 'scratch operand']
  #allocation3 [shape = 'f32[2,8]{1,0:T(2,128)}', space=vmem, size = 0x400, scoped, tag = 'scratch operand']
  #allocation4 [shape = 'f32[2,8]{1,0:T(2,128)}', space=vmem, size = 0x400, scoped, tag = 'scratch operand']
  #allocation5 [shape = 'f32[2,8]{1,0:T(2,128)}', space=vmem, size = 0x400, scoped, tag = 'scratch operand']
  %s0 = inlined_call_operand.vmem [shape: f32[2,8,256], index: 0, kind: input, shape index: {}]
  %s1 = inlined_call_operand.vmem [shape: f32[1,8], index: 1, kind: input, shape index: {}]
  %s2 = inlined_call_operand.vmem [shape: f32[1,8], index: 2, kind: input, shape index: {}]
  %s3 = inlined_call_operand.vmem [shape: f32[8,8], index: 3, kind: input, shape index: {}]
  %s4 = inlined_call_operand.vmem [shape: f32[1,8], index: 4, kind: input, shape index: {}]
  %s5 = inlined_call_operand.vmem [shape: f32[2,8,256], index: 5, kind: output, shape index: {}]
  %s6 = sld [smem:[#allocation0]]
  $region141: #{skip_squeeze_excitation.1} parent=0
    _
  %s8 = ssub.s32 1, %s6
  %s9 = scalar_select 0, %s8, %s6
  $region1: #{skip_squeeze_excitation.1} parent=0
    #allocation6 [shape = 'u8[16384]{0}', space=vmem, size = 0x4000, scoped, tag = 'input window, operand 0']
    #allocation7 [shape = 'u8[16384]{0}', space=vmem, size = 0x4000, scoped, tag = 'output window, operand 0']
    loop: start=0, step=1, limit=6
    $region2: #{skip_squeeze_excitation.1} parent=1 // loop_pre_header
      _
    $region3: #{skip_squeeze_excitation.1} parent=1 // loop_header
      %s11 = sphi 0, %s15
      %p12 = scmp.ge.s32.totalorder %s11, 6
      %s18 = sphi 0, %s30
      %s19 = sphi 0, %s26
      %s20 = sphi 0, %s18
      %s21 = sphi 0, %s19
      %s22 = sphi 0, %s20
      %s23 = sphi 0, %s21
      %s33 = sphi 0, %s35
      %s36 = sphi 0, %s33
      %s37 = sphi 0, %s36
      %s53 = sphi 0, %s37
      %s57 = sphi 0, %s57
      %s59 = sphi 0, %s57
      %s60 = sphi 0, %s59
      %s74 = sphi 0, %s60
      %s78 = sphi 0, %s78
      %s80 = sphi 0, %s78
      %s81 = sphi 0, %s80
      %s95 = sphi 0, %s81
      %s99 = sphi 0, %s99
      %s101 = sphi 0, %s99
      %s102 = sphi 0, %s101
      %s116 = sphi 0, %s102
      %s120 = sphi 0, %s120
      %s122 = sphi 0, %s120
      %s123 = sphi 0, %s122
      %s137 = sphi 0, %s123
      %s145 = sphi 0, %s147
      %s148 = sphi 0, %s145
      %s149 = sphi 0, %s148
      %s165 = sphi 0, %s149
    $region4: #{skip_squeeze_excitation.1} parent=1 // loop_header_branch
      %14 = sbr.rel (%p12) target = $region8
    $region5: #{skip_squeeze_excitation.1} parent=1 // loop_body
      %s16 = ssub.s32 %s11, 1
      %s17 = ssub.s32 %s11, 2
      %s24 = sadd.s32 1, %s19
      %p25 = scmp.ge.s32.totalorder %s24, 2
      %s26 = scalar_select %p25, 0, %s24
      %s27 = sadd.s32 1, %s18
      %s28 = scalar_select %p25, %s27, %s18
      %p29 = scmp.ge.s32.totalorder %s28, 2
      %s30 = scalar_select %p29, 0, %s28
      %s31 = ssub.s32 %s19, %s26
      %p32 = scmp.eq.s32.totalorder %s31, 0
      %s34 = sadd.s32 %s33, 1
      %s35 = scalar_select %p32, %s33, %s34
      %p38 = pneg %p32
      %p39 = scmp.eq.s32.totalorder %s11, 3
      %p40 = por %p38, %p39
      %p41 = scmp.ne.s32.totalorder %s33, %s36
      %p42 = scmp.eq.s32.totalorder %s11, 0
      %p43 = por %p41, %p42
      %p44 = scmp.ne.s32.totalorder %s33, %s36
      %p45 = scmp.eq.s32.totalorder %s16, 3
      %p46 = por %p44, %p45
      %p47 = scmp.ne.s32.totalorder %s36, %s37
      %p48 = scmp.eq.s32.totalorder %s16, 0
      %p49 = por %p47, %p48
      %p50 = scmp.ne.s32.totalorder %s36, %s37
      %p51 = scmp.eq.s32.totalorder %s17, 3
      %p52 = por %p50, %p51
      %p54 = scmp.ne.s32.totalorder %s37, %s53
      %p55 = scmp.eq.s32.totalorder %s17, 0
      %p56 = por %p54, %p55
      %s58 = sadd.s32 %s57, 1
      %p61 = scmp.eq.s32.totalorder %s11, 3
      %p62 = scmp.ne.s32.totalorder %s57, %s59
      %p63 = scmp.eq.s32.totalorder %s11, 0
      %p64 = por %p62, %p63
      %p65 = scmp.ne.s32.totalorder %s57, %s59
      %p66 = scmp.eq.s32.totalorder %s16, 3
      %p67 = por %p65, %p66
      %p68 = scmp.ne.s32.totalorder %s59, %s60
      %p69 = scmp.eq.s32.totalorder %s16, 0
      %p70 = por %p68, %p69
      %p71 = scmp.ne.s32.totalorder %s59, %s60
      %p72 = scmp.eq.s32.totalorder %s17, 3
      %p73 = por %p71, %p72
      %p75 = scmp.ne.s32.totalorder %s60, %s74
      %p76 = scmp.eq.s32.totalorder %s17, 0
      %p77 = por %p75, %p76
      %s79 = sadd.s32 %s78, 1
      %p82 = scmp.eq.s32.totalorder %s11, 3
      %p83 = scmp.ne.s32.totalorder %s78, %s80
      %p84 = scmp.eq.s32.totalorder %s11, 0
      %p85 = por %p83, %p84
      %p86 = scmp.ne.s32.totalorder %s78, %s80
      %p87 = scmp.eq.s32.totalorder %s16, 3
      %p88 = por %p86, %p87
      %p89 = scmp.ne.s32.totalorder %s80, %s81
      %p90 = scmp.eq.s32.totalorder %s16, 0
      %p91 = por %p89, %p90
      %p92 = scmp.ne.s32.totalorder %s80, %s81
      %p93 = scmp.eq.s32.totalorder %s17, 3
      %p94 = por %p92, %p93
      %p96 = scmp.ne.s32.totalorder %s81, %s95
      %p97 = scmp.eq.s32.totalorder %s17, 0
      %p98 = por %p96, %p97
      %s100 = sadd.s32 %s99, 1
      %p103 = scmp.eq.s32.totalorder %s11, 3
      %p104 = scmp.ne.s32.totalorder %s99, %s101
      %p105 = scmp.eq.s32.totalorder %s11, 0
      %p106 = por %p104, %p105
      %p107 = scmp.ne.s32.totalorder %s99, %s101
      %p108 = scmp.eq.s32.totalorder %s16, 3
      %p109 = por %p107, %p108
      %p110 = scmp.ne.s32.totalorder %s101, %s102
      %p111 = scmp.eq.s32.totalorder %s16, 0
      %p112 = por %p110, %p111
      %p113 = scmp.ne.s32.totalorder %s101, %s102
      %p114 = scmp.eq.s32.totalorder %s17, 3
      %p115 = por %p113, %p114
      %p117 = scmp.ne.s32.totalorder %s102, %s116
      %p118 = scmp.eq.s32.totalorder %s17, 0
      %p119 = por %p117, %p118
      %s121 = sadd.s32 %s120, 1
      %p124 = scmp.eq.s32.totalorder %s11, 3
      %p125 = scmp.ne.s32.totalorder %s120, %s122
      %p126 = scmp.eq.s32.totalorder %s11, 0
      %p127 = por %p125, %p126
      %p128 = scmp.ne.s32.totalorder %s120, %s122
      %p129 = scmp.eq.s32.totalorder %s16, 3
      %p130 = por %p128, %p129
      %p131 = scmp.ne.s32.totalorder %s122, %s123
      %p132 = scmp.eq.s32.totalorder %s16, 0
      %p133 = por %p131, %p132
      %p134 = scmp.ne.s32.totalorder %s122, %s123
      %p135 = scmp.eq.s32.totalorder %s17, 3
      %p136 = por %p134, %p135
      %p138 = scmp.ne.s32.totalorder %s123, %s137
      %p139 = scmp.eq.s32.totalorder %s17, 0
      %p140 = por %p138, %p139
      %s141 = smul.u32 %s19, %s18
      %s142 = smul.u32 %s26, %s30
      %s143 = ssub.s32 %s141, %s142
      %p144 = scmp.eq.s32.totalorder %s143, 0
      %s146 = sadd.s32 %s145, 1
      %s147 = scalar_select %p144, %s145, %s146
      %p150 = pneg %p144
      %p151 = scmp.eq.s32.totalorder %s11, 3
      %p152 = por %p150, %p151
      %p153 = scmp.ne.s32.totalorder %s145, %s148
      %p154 = scmp.eq.s32.totalorder %s11, 0
      %p155 = por %p153, %p154
      %p156 = scmp.ne.s32.totalorder %s145, %s148
      %p157 = scmp.eq.s32.totalorder %s16, 3
      %p158 = por %p156, %p157
      %p159 = scmp.ne.s32.totalorder %s148, %s149
      %p160 = scmp.eq.s32.totalorder %s16, 0
      %p161 = por %p159, %p160
      %p162 = scmp.ne.s32.totalorder %s148, %s149
      %p163 = scmp.eq.s32.totalorder %s17, 3
      %p164 = por %p162, %p163
      %p166 = scmp.ne.s32.totalorder %s149, %s165
      %p167 = scmp.eq.s32.totalorder %s17, 0
      %p168 = por %p166, %p167
      %p169 = scmp.le.s32.totalorder 1, %s11
      %p170 = scmp.lt.s32.totalorder %s11, 5
      %p171 = pnand %p169, %p170
      %p172 = pneg %p171
      // Predicated region
      $region9: #{skip_squeeze_excitation.1} parent=5 // pred_check
        _
      $region10: #{skip_squeeze_excitation.1} parent=5 // pred_check_branch
        %174 = sbr.rel (%p171) target = $region12
      $region11: #{skip_squeeze_excitation.1} parent=5 // pred_region
        %s175 = ssub.s32 %s11, 1
        // Predicated region
        $region13: #{skip_squeeze_excitation.1} parent=11 // pred_check
          %p176 = pneg %p70
        $region14: #{skip_squeeze_excitation.1} parent=11 // pred_check_branch
          %178 = sbr.rel (%p176) target = $region16
        $region15: #{skip_squeeze_excitation.1} parent=11 // pred_region
          _
        $region16: #{skip_squeeze_excitation.1} parent=11 // pred_fallthru
          _
        // Predicated region
        $region17: #{skip_squeeze_excitation.1} parent=11 // pred_check
          %p179 = pneg %p91
        $region18: #{skip_squeeze_excitation.1} parent=11 // pred_check_branch
          %181 = sbr.rel (%p179) target = $region20
        $region19: #{skip_squeeze_excitation.1} parent=11 // pred_region
          _
        $region20: #{skip_squeeze_excitation.1} parent=11 // pred_fallthru
          _
        // Predicated region
        $region21: #{skip_squeeze_excitation.1} parent=11 // pred_check
          %p182 = pneg %p112
        $region22: #{skip_squeeze_excitation.1} parent=11 // pred_check_branch
          %184 = sbr.rel (%p182) target = $region24
        $region23: #{skip_squeeze_excitation.1} parent=11 // pred_region
          _
        $region24: #{skip_squeeze_excitation.1} parent=11 // pred_fallthru
          _
        // Predicated region
        $region25: #{skip_squeeze_excitation.1} parent=11 // pred_check
          %p185 = pneg %p133
        $region26: #{skip_squeeze_excitation.1} parent=11 // pred_check_branch
          %187 = sbr.rel (%p185) target = $region28
        $region27: #{skip_squeeze_excitation.1} parent=11 // pred_region
          _
        $region28: #{skip_squeeze_excitation.1} parent=11 // pred_fallthru
          _
      $region12: #{skip_squeeze_excitation.1} parent=5 // pred_fallthru
        _
      %p188 = scmp.lt.s32.totalorder %s11, 4
      // Predicated region
      $region29: #{skip_squeeze_excitation.1} parent=5 // pred_check
        %p189 = pneg %p188
      $region30: #{skip_squeeze_excitation.1} parent=5 // pred_check_branch
        %191 = sbr.rel (%p189) target = $region32
      $region31: #{skip_squeeze_excitation.1} parent=5 // pred_region
        // Predicated region
        $region33: #{skip_squeeze_excitation.1} parent=31 // pred_check
          %p192 = pneg %p43
        $region34: #{skip_squeeze_excitation.1} parent=31 // pred_check_branch
          %194 = sbr.rel (%p192) target = $region36
        $region35: #{skip_squeeze_excitation.1} parent=31 // pred_region
          %s195 = sand.u32 %s33, 1
          %s196 = sand.u32 %s33, 1
          %s197 = smul.addr %s196, 16
          %s198 = scalar_lea.vmem [#allocation6], %s197
          %s199 = smul.addr %s19, 8
          %s200 = scalar_lea.vmem %s0, %s199
          // Predicated region
          $region37: #{skip_squeeze_excitation.1} parent=35 // pred_check
            _
          $region38: #{skip_squeeze_excitation.1} parent=35 // pred_check_branch
            %202 = sbr.rel (0) target = $region40
          $region39: #{skip_squeeze_excitation.1} parent=35 // pred_region
            // Predicated region
            $region41: #{skip_squeeze_excitation.1} parent=39 // pred_check
              _
            $region42: #{skip_squeeze_excitation.1} parent=39 // pred_check_branch
              %204 = sbr.rel (0) target = $region44
            $region43: #{skip_squeeze_excitation.1} parent=39 // pred_region
              // Predicated region
              $region56: #{skip_squeeze_excitation.1} parent=43 // pred_check
                _
              $region57: #{skip_squeeze_excitation.1} parent=43 // pred_check_branch
                %221 = sbr.rel (0) target = $region59
              $region58: #{skip_squeeze_excitation.1} parent=43 // pred_region
                loop: start=0, step=1, limit=1
                $region60: #{skip_squeeze_excitation.1} parent=58 // loop_pre_header
                  _
                $region61: #{skip_squeeze_excitation.1} parent=58 // loop_header
                  %s223 = sphi 0, %s227
                  %p224 = scmp.ge.s32.totalorder %s223, 1
                  %s228 = sphi %s200, %s200
                  %s229 = sphi %s198, %s198
                $region62: #{skip_squeeze_excitation.1} parent=58 // loop_header_branch
                  %226 = sbr.rel (%p224) target = $region66
                $region63: #{skip_squeeze_excitation.1} parent=58 // loop_body
                  %v230 = vld [vmem:[%s228] sm:$0xff]
                  %231 = vst [vmem:[%s229] sm:$0xff] %v230
                  %v232 = vld [vmem:[%s228 + $0x10] sm:$0xff]
                  %233 = vst [vmem:[%s229 + $0x8] sm:$0xff] %v232
                $region64: #{skip_squeeze_excitation.1} parent=58 // loop_footer
                  %s227 = sadd.s32 1, %s223
                $region65: #{skip_squeeze_excitation.1} parent=58 // loop_footer_branch
                  %222 = sbr.rel target = $region61
                $region66: #{skip_squeeze_excitation.1} parent=58 // loop_exit
                  _
              $region59: #{skip_squeeze_excitation.1} parent=43 // pred_fallthru
                _
              // Predicated region
              $region67: #{skip_squeeze_excitation.1} parent=43 // pred_check
                _
              $region68: #{skip_squeeze_excitation.1} parent=43 // pred_check_branch
                %235 = sbr.rel target = $region70
              $region69: #{skip_squeeze_excitation.1} parent=43 // pred_region
                _
              $region70: #{skip_squeeze_excitation.1} parent=43 // pred_fallthru
                _
            $region44: #{skip_squeeze_excitation.1} parent=39 // pred_fallthru
              _
            // Predicated region
            $region45: #{skip_squeeze_excitation.1} parent=39 // pred_check
              _
            $region46: #{skip_squeeze_excitation.1} parent=39 // pred_check_branch
              %206 = sbr.rel target = $region48
            $region47: #{skip_squeeze_excitation.1} parent=39 // pred_region
              loop: start=0, step=1, limit=1
              $region49: #{skip_squeeze_excitation.1} parent=47 // loop_pre_header
                _
              $region50: #{skip_squeeze_excitation.1} parent=47 // loop_header
                %s209 = sphi 0, %s213
                %p210 = scmp.ge.s32.totalorder %s209, 1
                %s214 = sphi %s200, %s200
                %s215 = sphi %s198, %s198
              $region51: #{skip_squeeze_excitation.1} parent=47 // loop_header_branch
                %212 = sbr.rel (%p210) target = $region55
              $region52: #{skip_squeeze_excitation.1} parent=47 // loop_body
                %v216 = vld [vmem:[%s214] sm:$0xff]
                %217 = vst [vmem:[%s215] sm:$0xff] %v216
                %v218 = vld [vmem:[%s214 + $0x10] sm:$0xff]
                %219 = vst [vmem:[%s215 + $0x8] sm:$0xff] %v218
              $region53: #{skip_squeeze_excitation.1} parent=47 // loop_footer
                %s213 = sadd.s32 1, %s209
              $region54: #{skip_squeeze_excitation.1} parent=47 // loop_footer_branch
                %208 = sbr.rel target = $region50
              $region55: #{skip_squeeze_excitation.1} parent=47 // loop_exit
                _
            $region48: #{skip_squeeze_excitation.1} parent=39 // pred_fallthru
              _
          $region40: #{skip_squeeze_excitation.1} parent=35 // pred_fallthru
            _
          %236 = vnop
        $region36: #{skip_squeeze_excitation.1} parent=31 // pred_fallthru
          _
      $region32: #{skip_squeeze_excitation.1} parent=5 // pred_fallthru
        _
      %p237 = scmp.le.s32.totalorder 1, %s11
      %p238 = scmp.lt.s32.totalorder %s11, 5
      %p239 = pnand %p237, %p238
      %p240 = pneg %p239
      // Predicated region
      $region71: #{skip_squeeze_excitation.1} parent=5 // pred_check
        _
      $region72: #{skip_squeeze_excitation.1} parent=5 // pred_check_branch
        %242 = sbr.rel (%p239) target = $region74
      $region73: #{skip_squeeze_excitation.1} parent=5 // pred_region
        %s243 = ssub.s32 %s11, 1
        %s244 = sand.u32 %s36, 1
        %s245 = sand.u32 %s36, 1
        %s246 = smul.addr %s245, 16
        %s247 = scalar_lea.vmem [#allocation6], %s246
        // Predicated region
        $region75: #{skip_squeeze_excitation.1} parent=73 // pred_check
          %p248 = pneg %p49
        $region76: #{skip_squeeze_excitation.1} parent=73 // pred_check_branch
          %250 = sbr.rel (%p248) target = $region78
        $region77: #{skip_squeeze_excitation.1} parent=73 // pred_region
          _
        $region78: #{skip_squeeze_excitation.1} parent=73 // pred_fallthru
          _
        %s251 = sand.u32 %s36, 1
        %s252 = sand.u32 %s36, 1
        %s253 = smul.addr %s252, 16
        %s254 = scalar_lea.vmem [#allocation6], %s253
        %p255 = pneg %p49
        %p256 = pneg %p46
        %p257 = pneg %p70
        %p258 = pneg %p67
        %p259 = pneg %p91
        %p260 = pneg %p88
        %p261 = pneg %p112
        %p262 = pneg %p109
        %p263 = pneg %p133
        %p264 = pneg %p130
        %p265 = pneg %p161
        %p266 = pneg %p158
        %s267 = sand.u32 %s148, 1
        %s268 = sand.u32 %s148, 1
        %s269 = smul.addr %s268, 16
        %s270 = scalar_lea.vmem [#allocation7], %s269
        %s271 = smul.u32 %s21, %s20
        %p272 = scmp.eq.s32.totalorder %s20, 0
        %p273 = scmp.eq.s32.totalorder %s21, 0
        %p274 = pnand %p272, %p273
        %p275 = pneg %p274
        // Predicated region
        $region79: #{skip_squeeze_excitation.1} parent=73 // pred_check
          _
        $region80: #{skip_squeeze_excitation.1} parent=73 // pred_check_branch
          %277 = sbr.rel (%p274) target = $region82
        $region81: #{skip_squeeze_excitation.1} parent=73 // pred_region
          %vm278 = vcmask 58368
          %279 = vst.msk [vmem:[#allocation2] sm:$0x3] %vm278, 0.0
          %280 = vst.msk [vmem:[#allocation3] sm:$0x3] %vm278, 0.0
        $region82: #{skip_squeeze_excitation.1} parent=73 // pred_fallthru
          _
        // Predicated region
        $region83: #{skip_squeeze_excitation.1} parent=73 // pred_check
          %p281 = pneg %p272
        $region84: #{skip_squeeze_excitation.1} parent=73 // pred_check_branch
          %283 = sbr.rel (%p281) target = $region86
        $region85: #{skip_squeeze_excitation.1} parent=73 // pred_region
          %v284 = vld [vmem:[%s247] sm:$0xff]
          %v285 = vld [vmem:[%s247 + $0x8] sm:$0xff]
          %v286 = vld [vmem:[#allocation2] sm:$0x3]
          %287 = vadd.xlane.f32.xlu0 %v284
          %v288 = vpop.xlane.xlu0 %287
          %289 = vadd.xlane.f32.xlu0 %v285
          %v290 = vpop.xlane.xlu0 %289
          %v293 = vlaneseq
          %v294 = vand.u32 %v293, 127
          %v295 = vlaneseq
          %v296 = vshrl.u32 %v295, 7
          %v297 = vsub.s32 %v294, %v296
          %v298 = vrot.slane %v288, %v297
          %v299 = vlaneseq
          %v300 = vshrl.u32 %v299, 7
          %v301 = vsub.s32 %v294, %v300
          %v302 = vrot.slane %v290, %v301
          %vm303 = vcmask 1041409
          %v304 = vsel %vm303, %v302, %v298
          %v306 = vadd.f32 %v286, %v304
          %vm307 = vcmask 58368
          %308 = vst.msk [vmem:[#allocation2] sm:$0x3] %vm307, %v306
          %v309 = vld [vmem:[#allocation3] sm:$0x3]
          %v310 = vmul.f32 %v284, %v284
          %v311 = vmul.f32 %v285, %v285
          %312 = vadd.xlane.f32.xlu0 %v310
          %v313 = vpop.xlane.xlu0 %312
          %314 = vadd.xlane.f32.xlu0 %v311
          %v315 = vpop.xlane.xlu0 %314
          %v318 = vlaneseq
          %v319 = vshrl.u32 %v318, 7
          %v320 = vsub.s32 %v294, %v319
          %v321 = vrot.slane %v313, %v320
          %v322 = vlaneseq
          %v323 = vshrl.u32 %v322, 7
          %v324 = vsub.s32 %v294, %v323
          %v325 = vrot.slane %v315, %v324
          %v326 = vsel %vm303, %v325, %v321
          %v328 = vadd.f32 %v309, %v326
          %329 = vst.msk [vmem:[#allocation3] sm:$0x3] %vm307, %v328
        $region86: #{skip_squeeze_excitation.1} parent=73 // pred_fallthru
          _
        %p330 = scmp.eq.s32.totalorder %s20, 1
        %p331 = pnand %p330, %p273
        %p332 = pneg %p331
        // Predicated region
        $region87: #{skip_squeeze_excitation.1} parent=73 // pred_check
          _
        $region88: #{skip_squeeze_excitation.1} parent=73 // pred_check_branch
          %334 = sbr.rel (%p331) target = $region90
        $region89: #{skip_squeeze_excitation.1} parent=73 // pred_region
          %v335 = vld [vmem:[#allocation2] sm:$0x3]
          %v336 = vld [vmem:[#allocation3] sm:$0x3]
          %vm337 = vcmask 58368
          %v338 = vsel %vm337, %v335, 0.0
          %v339 = vrot.slane %v338, 4
          %v340 = vadd.f32 %v338, %v339
          %v341 = vrot.slane %v340, 2
          %v342 = vadd.f32 %v340, %v341
          %v343 = vrot.slane %v342, 1
          %v344 = vadd.f32 %v342, %v343
          %v345 = vsel %vm337, %v336, 0.0
          %v346 = vrot.slane %v345, 4
          %v347 = vadd.f32 %v345, %v346
          %v348 = vrot.slane %v347, 2
          %v349 = vadd.f32 %v347, %v348
          %v350 = vrot.slane %v349, 1
          %v351 = vadd.f32 %v349, %v350
          %v352 = vmul.f32 %v344, 0.001953125
          %v353 = vmul.f32 %v351, 0.001953125
          %v354 = vmul.f32 %v352, %v352
          %v355 = vsub.f32 %v353, %v354
          %v356 = vmax.f32 %v355, 0.0
          %v357 = vadd.f32 %v356, 1e-05
          %v358 = vrsqrt.pop %v357
          %v359 = vld [vmem:[%s1] sm:$0x1]
          %v360 = vmul.f32 %v358, %v359
          %v361 = vld [vmem:[%s2] sm:$0x1]
          %v362 = vmul.f32 %v352, %v360
          %v363 = vsub.f32 %v361, %v362
          %v364 = vmul.f32 %v335, 0.00390625
          %v365 = vlaneseq
          %v366 = vshrl.u32 %v365, 7
          %v367 = vsub.s32 0, %v366
          %v368 = vrot.slane %v360, %v367
          %v369 = vmul.f32 %v364, %v368
          %v371 = vlaneseq
          %v372 = vshrl.u32 %v371, 7
          %v373 = vsub.s32 0, %v372
          %v374 = vrot.slane %v363, %v373
          %v376 = vadd.f32 %v369, %v374
          %v377 = vld [vmem:[%s3] sm:$0xff]
          %v378 = vlaneseq
          %v379 = vshrl.u32 %v378, 7
          %v380 = vsub.s32 0, %v379
          %v381 = vrot.slane %v376, %v380
          %383 = vbcast.lane.b32.xlu0 %v381, 256
          %v384 = vpop.permute.xlu0 %383
          %v385 = vlaneseq
          %v386 = vshrl.u32 %v385, 7
          %v387 = vsub.s32 1, %v386
          %v388 = vrot.slane %v376, %v387
          %390 = vbcast.lane.b32.xlu0 %v388, 256
          %v391 = vpop.permute.xlu0 %390
          %v392 = vmul.f32 %v384, %v377
          %v393 = vmul.f32 %v391, %v377
          %vm394 = vcmask 64512
          %v395 = vsel %vm394, %v392, 0.0
          %v396 = vrot.slane %v395, 4
          %v397 = vadd.f32 %v395, %v396
          %v398 = vrot.slane %v397, 2
          %v399 = vadd.f32 %v397, %v398
          %v400 = vrot.slane %v399, 1
          %v401 = vadd.f32 %v399, %v400
          %v402 = vsel %vm394, %v393, 0.0
          %v403 = vrot.slane %v402, 4
          %v404 = vadd.f32 %v402, %v403
          %v405 = vrot.slane %v404, 2
          %v406 = vadd.f32 %v404, %v405
          %v407 = vrot.slane %v406, 1
          %v408 = vadd.f32 %v406, %v407
          %v409 = vld [vmem:[%s4] sm:$0x1]
          %v411 = vlaneseq
          %v412 = vshrl.u32 %v411, 7
          %v413 = vsub.s32 0, %v412
          %v414 = vrot.slane %v409, %v413
          %v416 = vadd.f32 %v401, %v414
          %v417 = vadd.f32 %v408, %v414
          %v418 = vxor.u32 %v416, 2147483648
          %v419 = vxor.u32 %v417, 2147483648
          %v420 = vmul.f32 %v418, 1.442695
          %v421 = vpow.pop %v420
          %v422 = vmul.f32 %v419, 1.442695
          %v423 = vpow.pop %v422
          %v424 = vadd.f32 %v421, 1.0
          %v425 = vadd.f32 %v423, 1.0
          %v426 = vrcp.pop %v424
          %v427 = vmul.f32 1.0, %v426
          %v428 = vrcp.pop %v425
          %v429 = vmul.f32 1.0, %v428
          %v432 = vrot.slane %v429, 7
          %vm433 = vcmask 1041409
          %v434 = vsel %vm433, %v432, %v427
          %v436 = vmul.f32 %v368, %v434
          %437 = vst.msk [vmem:[#allocation4] sm:$0x3] %vm337, %v436
          %v438 = vmul.f32 %v374, %v434
          %439 = vst.msk [vmem:[#allocation5] sm:$0x3] %vm337, %v438
        $region90: #{skip_squeeze_excitation.1} parent=73 // pred_fallthru
          _
        // Predicated region
        $region91: #{skip_squeeze_excitation.1} parent=73 // pred_check
          %p440 = pneg %p330
        $region92: #{skip_squeeze_excitation.1} parent=73 // pred_check_branch
          %442 = sbr.rel (%p440) target = $region94
        $region93: #{skip_squeeze_excitation.1} parent=73 // pred_region
          %v443 = vld [vmem:[%s247] sm:$0xff]
          %v444 = vld [vmem:[%s247 + $0x8] sm:$0xff]
          %v445 = vld [vmem:[#allocation4] sm:$0x3]
          %v446 = vlaneseq
          %v447 = vshrl.u32 %v446, 7
          %v448 = vsub.s32 0, %v447
          %v449 = vrot.slane %v445, %v448
          %451 = vbcast.lane.b32.xlu0 %v449, 256
          %v452 = vpop.permute.xlu0 %451
          %v453 = vlaneseq
          %v454 = vshrl.u32 %v453, 7
          %v455 = vsub.s32 1, %v454
          %v456 = vrot.slane %v445, %v455
          %458 = vbcast.lane.b32.xlu0 %v456, 256
          %v459 = vpop.permute.xlu0 %458
          %v460 = vld [vmem:[#allocation5] sm:$0x3]
          %v461 = vlaneseq
          %v462 = vshrl.u32 %v461, 7
          %v463 = vsub.s32 0, %v462
          %v464 = vrot.slane %v460, %v463
          %466 = vbcast.lane.b32.xlu0 %v464, 256
          %v467 = vpop.permute.xlu0 %466
          %v468 = vlaneseq
          %v469 = vshrl.u32 %v468, 7
          %v470 = vsub.s32 1, %v469
          %v471 = vrot.slane %v460, %v470
          %473 = vbcast.lane.b32.xlu0 %v471, 256
          %v474 = vpop.permute.xlu0 %473
          %v475 = vmul.f32 %v443, %v452
          %v476 = vmul.f32 %v444, %v459
          %v477 = vadd.f32 %v475, %v467
          %v478 = vadd.f32 %v476, %v474
          %479 = vst [vmem:[%s270] sm:$0xff] %v477
          %480 = vst [vmem:[%s270 + $0x8] sm:$0xff] %v478
        $region94: #{skip_squeeze_excitation.1} parent=73 // pred_fallthru
          _
        %s481 = sand.u32 %s148, 1
        %s482 = sand.u32 %s148, 1
        %s483 = smul.addr %s482, 16
        %s484 = scalar_lea.vmem [#allocation7], %s483
        // Predicated region
        $region95: #{skip_squeeze_excitation.1} parent=73 // pred_check
          %p485 = pneg %p158
        $region96: #{skip_squeeze_excitation.1} parent=73 // pred_check_branch
          %487 = sbr.rel (%p485) target = $region98
        $region97: #{skip_squeeze_excitation.1} parent=73 // pred_region
          %s488 = smul.u32 %s21, %s20
          %s489 = smul.addr %s488, 8
          %s490 = scalar_lea.vmem %s5, %s489
          // Predicated region
          $region99: #{skip_squeeze_excitation.1} parent=97 // pred_check
            _
          $region100: #{skip_squeeze_excitation.1} parent=97 // pred_check_branch
            %492 = sbr.rel (0) target = $region102
          $region101: #{skip_squeeze_excitation.1} parent=97 // pred_region
            // Predicated region
            $region103: #{skip_squeeze_excitation.1} parent=101 // pred_check
              _
            $region104: #{skip_squeeze_excitation.1} parent=101 // pred_check_branch
              %494 = sbr.rel (0) target = $region106
            $region105: #{skip_squeeze_excitation.1} parent=101 // pred_region
              // Predicated region
              $region118: #{skip_squeeze_excitation.1} parent=105 // pred_check
                _
              $region119: #{skip_squeeze_excitation.1} parent=105 // pred_check_branch
                %511 = sbr.rel (0) target = $region121
              $region120: #{skip_squeeze_excitation.1} parent=105 // pred_region
                loop: start=0, step=1, limit=1
                $region122: #{skip_squeeze_excitation.1} parent=120 // loop_pre_header
                  _
                $region123: #{skip_squeeze_excitation.1} parent=120 // loop_header
                  %s513 = sphi 0, %s517
                  %p514 = scmp.ge.s32.totalorder %s513, 1
                  %s518 = sphi %s484, %s484
                  %s519 = sphi %s490, %s490
                $region124: #{skip_squeeze_excitation.1} parent=120 // loop_header_branch
                  %516 = sbr.rel (%p514) target = $region128
                $region125: #{skip_squeeze_excitation.1} parent=120 // loop_body
                  %v520 = vld [vmem:[%s518] sm:$0xff]
                  %521 = vst [vmem:[%s519] sm:$0xff] %v520
                  %v522 = vld [vmem:[%s518 + $0x8] sm:$0xff]
                  %523 = vst [vmem:[%s519 + $0x10] sm:$0xff] %v522
                $region126: #{skip_squeeze_excitation.1} parent=120 // loop_footer
                  %s517 = sadd.s32 1, %s513
                $region127: #{skip_squeeze_excitation.1} parent=120 // loop_footer_branch
                  %512 = sbr.rel target = $region123
                $region128: #{skip_squeeze_excitation.1} parent=120 // loop_exit
                  _
              $region121: #{skip_squeeze_excitation.1} parent=105 // pred_fallthru
                _
              // Predicated region
              $region129: #{skip_squeeze_excitation.1} parent=105 // pred_check
                _
              $region130: #{skip_squeeze_excitation.1} parent=105 // pred_check_branch
                %525 = sbr.rel target = $region132
              $region131: #{skip_squeeze_excitation.1} parent=105 // pred_region
                _
              $region132: #{skip_squeeze_excitation.1} parent=105 // pred_fallthru
                _
            $region106: #{skip_squeeze_excitation.1} parent=101 // pred_fallthru
              _
            // Predicated region
            $region107: #{skip_squeeze_excitation.1} parent=101 // pred_check
              _
            $region108: #{skip_squeeze_excitation.1} parent=101 // pred_check_branch
              %496 = sbr.rel target = $region110
            $region109: #{skip_squeeze_excitation.1} parent=101 // pred_region
              loop: start=0, step=1, limit=1
              $region111: #{skip_squeeze_excitation.1} parent=109 // loop_pre_header
                _
              $region112: #{skip_squeeze_excitation.1} parent=109 // loop_header
                %s499 = sphi 0, %s503
                %p500 = scmp.ge.s32.totalorder %s499, 1
                %s504 = sphi %s484, %s484
                %s505 = sphi %s490, %s490
              $region113: #{skip_squeeze_excitation.1} parent=109 // loop_header_branch
                %502 = sbr.rel (%p500) target = $region117
              $region114: #{skip_squeeze_excitation.1} parent=109 // loop_body
                %v506 = vld [vmem:[%s504] sm:$0xff]
                %507 = vst [vmem:[%s505] sm:$0xff] %v506
                %v508 = vld [vmem:[%s504 + $0x8] sm:$0xff]
                %509 = vst [vmem:[%s505 + $0x10] sm:$0xff] %v508
              $region115: #{skip_squeeze_excitation.1} parent=109 // loop_footer
                %s503 = sadd.s32 1, %s499
              $region116: #{skip_squeeze_excitation.1} parent=109 // loop_footer_branch
                %498 = sbr.rel target = $region112
              $region117: #{skip_squeeze_excitation.1} parent=109 // loop_exit
                _
            $region110: #{skip_squeeze_excitation.1} parent=101 // pred_fallthru
              _
          $region102: #{skip_squeeze_excitation.1} parent=97 // pred_fallthru
            _
          %526 = vnop
        $region98: #{skip_squeeze_excitation.1} parent=73 // pred_fallthru
          _
      $region74: #{skip_squeeze_excitation.1} parent=5 // pred_fallthru
        _
      %p527 = scmp.le.s32.totalorder 2, %s11
      // Predicated region
      $region133: #{skip_squeeze_excitation.1} parent=5 // pred_check
        %p528 = pneg %p527
      $region134: #{skip_squeeze_excitation.1} parent=5 // pred_check_branch
        %530 = sbr.rel (%p528) target = $region136
      $region135: #{skip_squeeze_excitation.1} parent=5 // pred_region
        %s531 = ssub.s32 %s11, 2
        // Predicated region
        $region137: #{skip_squeeze_excitation.1} parent=135 // pred_check
          %p532 = pneg %p164
        $region138: #{skip_squeeze_excitation.1} parent=135 // pred_check_branch
          %534 = sbr.rel (%p532) target = $region140
        $region139: #{skip_squeeze_excitation.1} parent=135 // pred_region
          %s535 = sand.u32 %s149, 1
          %s536 = sand.u32 %s149, 1
          %s537 = smul.addr %s536, 16
          %s538 = scalar_lea.vmem [#allocation7], %s537
        $region140: #{skip_squeeze_excitation.1} parent=135 // pred_fallthru
          _
      $region136: #{skip_squeeze_excitation.1} parent=5 // pred_fallthru
        _
    $region6: #{skip_squeeze_excitation.1} parent=1 // loop_footer
      %s15 = sadd.s32 1, %s11
    $region7: #{skip_squeeze_excitation.1} parent=1 // loop_footer_branch
      %10 = sbr.rel target = $region3
    $region8: #{skip_squeeze_excitation.1} parent=1 // loop_exit
      _

</llo_original>
